<compile_context>
chip_gen: v6e
topology: v6e:2x2x1
jax: 0.10.0
libtpu: 0.0.40
codegen_flags: <defaults>
</compile_context>

<pallas_src>
import functools

import jax
import jax.numpy as jnp
from jax import lax
from jax.experimental import pallas as pl
from jax.experimental.pallas import tpu as pltpu

KERNEL_SIZES = (3, 5, 9, 15)
_NEG_INF = float("-inf")


def _round_up(x, m):
    return (x + m - 1) // m * m


def _schedule(kernel_sizes):
    """Hierarchical window-max build plan.

    Level 0 is a separable (2*r0+1)^2 window max of the raw canvas; level i>0
    is a separable max over shift_sets[i] (rows and cols) of level i-1.
    """
    for k in kernel_sizes:
        if k % 2 != 1:
            raise ValueError("kernel sizes must be odd")
    if list(kernel_sizes) != sorted(set(kernel_sizes)):
        raise ValueError("kernel sizes must be strictly increasing")
    radii = [k // 2 for k in kernel_sizes]
    shift_sets = [tuple(range(-radii[0], radii[0] + 1))]
    for prev, cur in zip(radii[:-1], radii[1:]):
        d = cur - prev
        if d <= prev:                      # 2-shift coverage of [-cur, cur]
            shift_sets.append((-d, d))
        elif d <= 2 * prev + 1:            # 3-shift coverage
            shift_sets.append((-d, 0, d))
        else:
            raise NotImplementedError("kernel-size gap too large for reuse")
    # Static containment check: the total shift reach from the deepest level
    # back to the raw canvas must equal the largest radius (= halo width) so
    # every needed read stays inside the initialised -inf halo.
    total_reach = radii[0] + sum(max(s) for s in shift_sets[1:])
    assert total_reach == radii[-1], (total_reach, radii)
    return tuple(radii), tuple(shift_sets)


def _wmp_kernel(x_ref, mw_ref, out_ref, wa_ref, wb_ref, *,
                H, W, Bblk, halo, row_stride, shift_sets):
    # x_ref  : (Bblk, H, W)      ft_score block (channel squeezed)
    # mw_ref : (Bblk, P, H, W)   mask_weight block
    # out_ref: (Bblk, H, W)      output block   (channel squeezed)
    # wa/wb  : (HP, WP) f32      ping-pong canvases (stacked batch + halo)
    f32 = jnp.float32
    HP, WP = wa_ref.shape
    col0 = halo
    band_h = row_stride - H            # -inf rows below each stacked image

    # ---- 1. raw canvas: aligned image interiors, -inf only where read ------
    wa_ref[0:halo, :] = jnp.full((halo, WP), _NEG_INF, f32)
    wa_ref[:, 0:col0] = jnp.full((HP, col0), _NEG_INF, f32)
    wa_ref[:, col0 + W:col0 + W + halo] = jnp.full((HP, halo), _NEG_INF, f32)
    for b in range(Bblk):
        r0 = halo + b * row_stride                     # multiple of 8
        wa_ref[r0:r0 + H, col0:col0 + W] = x_ref[b].astype(f32)
        wa_ref[r0 + H:r0 + row_stride, :] = jnp.full((band_h, WP),
                                                     _NEG_INF, f32)

    # ---- 2. hierarchical window maxima via lane/sublane rolls ---------------
    def build_level(src_ref, dst_ref, shifts):
        # dst[y, x] = max_{dy, dx in shifts} src[y + dy, x + dx], full plane.
        # The symmetric shift sets make the roll direction irrelevant; wrap
        # never reaches consumed positions because the halo >= total reach.
        p = src_ref[...]
        cm = None
        for s in shifts:                 # lane (column) pass - XLU rolls
            t = p if s == 0 else pltpu.roll(p, (-s) % WP, axis=1)
            cm = t if cm is None else jnp.maximum(cm, t)
        rm = None
        for s in shifts:                 # sublane (row) pass
            t = cm if s == 0 else pltpu.roll(cm, (-s) % HP, axis=0)
            rm = t if rm is None else jnp.maximum(rm, t)
        dst_ref[...] = rm

    def consume(level_ref, idx):
        # out[b] (+)= mask_weight[b, idx] where the pixel equals its window max.
        for b in range(Bblk):
            r0 = halo + b * row_stride
            pooled = level_ref[r0:r0 + H, col0:col0 + W]
            center = x_ref[b].astype(f32)
            w = mw_ref[b, idx]
            contrib = jnp.where(pooled == center, w, jnp.zeros_like(w))
            if idx == 0:
                out_ref[b] = contrib
            else:
                out_ref[b] = out_ref[b] + contrib

    # Ping-pong: the raw canvas (wa) is only needed to build level 0, so two
    # planes cover the whole hierarchy.
    src, dst = wa_ref, wb_ref
    for lvl, shifts in enumerate(shift_sets):
        build_level(src, dst, shifts)
        consume(dst, lvl)
        src, dst = dst, src


def weighted_max_pool(mask_weight, ft_score, kernel_sizes=KERNEL_SIZES,
                      batch_block=None, max_batch_block=16):
    kernel_sizes = tuple(int(k) for k in kernel_sizes)
    B, n_pool, H, W = mask_weight.shape
    assert n_pool == len(kernel_sizes)
    assert ft_score.shape == (B, 1, H, W)

    radii, shift_sets = _schedule(kernel_sizes)
    R = radii[-1]
    halo = _round_up(max(R, 1), 8)           # row/col -inf halo, 8-aligned
    row_stride = _round_up(H, 8) + halo      # per stacked image (aligned starts)
    WP = _round_up(halo + W + halo, 128)     # lane-tile-aligned canvas width

    # VMEM capacity differs per generation (v5e/v6e: 128 MiB, v7x: 64 MiB per
    # TensorCore); budget blocks and the scoped limit from the real capacity.
    try:
        vmem_cap = int(pltpu.get_tpu_info().vmem_capacity_bytes)
    except Exception:  # conservative default that fits every generation
        vmem_cap = 64 * 1024 * 1024
    budget = max(vmem_cap - 16 * 1024 * 1024, vmem_cap // 2)

    def footprint(bb):
        hp = halo + bb * row_stride
        planes = 2 * hp * WP * 4
        blocks = 2 * bb * H * W * (ft_score.dtype.itemsize
                                   + (n_pool + 1) * mask_weight.dtype.itemsize)
        return planes + blocks

    if batch_block is None:
        # Largest divisor of B that fits the budget, keeping >= 2 grid steps
        # (both v7x TensorCores / megacore get work) and a bounded unroll.
        cap_bb = B if B < 2 else max(1, B // 2)
        cap_bb = min(cap_bb, max_batch_block)
        batch_block = 1
        for bb in range(1, cap_bb + 1):
            if B % bb == 0 and footprint(bb) <= budget:
                batch_block = bb
    assert B % batch_block == 0
    grid = (B // batch_block,)
    HP = halo + batch_block * row_stride

    vmem_limit = int(min(vmem_cap - (8 << 20),
                         max(budget, int(footprint(batch_block) * 1.25))))

    kernel = functools.partial(
        _wmp_kernel, H=H, W=W, Bblk=batch_block,
        halo=halo, row_stride=row_stride, shift_sets=shift_sets)

    return pl.pallas_call(
        kernel,
        out_shape=jax.ShapeDtypeStruct((B, 1, H, W), mask_weight.dtype),
        grid_spec=pltpu.PrefetchScalarGridSpec(
            num_scalar_prefetch=0,
            grid=grid,
            in_specs=[
                pl.BlockSpec((batch_block, pl.Squeezed(), H, W),
                             lambda g: (g, 0, 0, 0)),
                pl.BlockSpec((batch_block, n_pool, H, W),
                             lambda g: (g, 0, 0, 0)),
            ],
            out_specs=pl.BlockSpec((batch_block, pl.Squeezed(), H, W),
                                   lambda g: (g, 0, 0, 0)),
            scratch_shapes=[
                pltpu.VMEM((HP, WP), jnp.float32),   # raw canvas / level ping
                pltpu.VMEM((HP, WP), jnp.float32),   # level pong
            ],
        ),
        compiler_params=pltpu.CompilerParams(
            dimension_semantics=("parallel",),
            vmem_limit_bytes=vmem_limit,
        ),
    )(ft_score, mask_weight)


def weighted_max_pool_ref(mask_weight, ft_score, kernel_sizes=KERNEL_SIZES):
    # Plain-JAX reference (mirrors the PyTorch forward) for verification.
    acc = jnp.zeros_like(ft_score).astype(mask_weight.dtype)
    for idx, k in enumerate(kernel_sizes):
        r = k // 2
        pooled = lax.reduce_window(
            ft_score, -jnp.inf, lax.max,
            window_dimensions=(1, 1, k, k),
            window_strides=(1, 1, 1, 1),
            padding=((0, 0), (0, 0), (r, r), (r, r)))
        mask = (pooled == ft_score).astype(mask_weight.dtype)
        acc = acc + mask * mask_weight[:, idx:idx + 1]
    return acc


if __name__ == "__main__":
    key = jax.random.PRNGKey(0)
    k1, k2 = jax.random.split(key)

    B, n_pool, H, W = 2, len(KERNEL_SIZES), 16, 16
    # Deterministic synthetic inputs (no checkpoint / external data).
    mask_weight = jax.random.uniform(k1, (B, n_pool, H, W), dtype=jnp.float32)
    ft_score = jax.random.uniform(k2, (B, 1, H, W), dtype=jnp.float32)

    out = weighted_max_pool(mask_weight, ft_score)
    out = jax.block_until_ready(out)

    ref = weighted_max_pool_ref(mask_weight, ft_score)
    assert out.shape == (B, 1, H, W)
    assert jnp.allclose(out, ref, atol=1e-6), "mismatch vs reference"

    print("KERNEL_OK")
</pallas_src>

<mosaic_0001>
module attributes {stable_mosaic.version = 11 : i64} {
  func.func @_wmp_kernel(%arg0: i32, %arg1: memref<1x1x16x16xf32, #tpu.memory_space<vmem>>, %arg2: memref<1x4x16x16xf32, #tpu.memory_space<vmem>>, %arg3: memref<1x1x16x16xf32, #tpu.memory_space<vmem>>, %arg4: memref<32x128xf32, #tpu.memory_space<vmem>>, %arg5: memref<32x128xf32, #tpu.memory_space<vmem>>) attributes {dimension_semantics = [#tpu.dimension_semantics<parallel>], iteration_bounds = array<i64: 2>, scalar_prefetch = 0 : i64, scratch_operands = 2 : i64, tpu.core_type = #tpu.core_type<tc>, window_params = [{transform_indices = @transform_0, window_bounds = array<i64: 1, 1, 16, 16>}, {transform_indices = @transform_1, window_bounds = array<i64: 1, 4, 16, 16>}, {transform_indices = @transform_2, window_bounds = array<i64: 1, 1, 16, 16>}]} {
    %cst = arith.constant 0xFF800000 : f32
    %0 = vector.broadcast %cst : f32 to vector<8x128xf32>
    %c0 = arith.constant 0 : index
    %c0_0 = arith.constant 0 : index
    %1 = vector.load %arg4[%c0, %c0_0] : memref<32x128xf32, #tpu.memory_space<vmem>>, vector<8x128xf32>
    tpu.vector_store %arg4[%c0, %c0_0], %0 {strides = array<i32>} : memref<32x128xf32, #tpu.memory_space<vmem>>, vector<8x128xf32>,
    %cst_1 = arith.constant 0xFF800000 : f32
    %2 = vector.broadcast %cst_1 : f32 to vector<32x8xf32>
    %c0_2 = arith.constant 0 : index
    %c0_3 = arith.constant 0 : index
    %3 = vector.load %arg4[%c0_2, %c0_3] : memref<32x128xf32, #tpu.memory_space<vmem>>, vector<32x8xf32>
    tpu.vector_store %arg4[%c0_2, %c0_3], %2 {strides = array<i32>} : memref<32x128xf32, #tpu.memory_space<vmem>>, vector<32x8xf32>,
    %cst_4 = arith.constant 0xFF800000 : f32
    %4 = vector.broadcast %cst_4 : f32 to vector<32x8xf32>
    %c0_5 = arith.constant 0 : index
    %c24 = arith.constant 24 : index
    %5 = vector.load %arg4[%c0_5, %c24] : memref<32x128xf32, #tpu.memory_space<vmem>>, vector<32x8xf32>
    tpu.vector_store %arg4[%c0_5, %c24], %4 {strides = array<i32>} : memref<32x128xf32, #tpu.memory_space<vmem>>, vector<32x8xf32>,
    %c0_6 = arith.constant 0 : index
    %c0_7 = arith.constant 0 : index
    %c0_8 = arith.constant 0 : index
    %c0_9 = arith.constant 0 : index
    %6 = vector.load %arg1[%c0_6, %c0_7, %c0_8, %c0_9] : memref<1x1x16x16xf32, #tpu.memory_space<vmem>>, vector<1x1x16x16xf32>
    %7 = vector.shape_cast %6 : vector<1x1x16x16xf32> to vector<16x16xf32>
    %c8 = arith.constant 8 : index
    %c8_10 = arith.constant 8 : index
    %8 = vector.load %arg4[%c8, %c8_10] : memref<32x128xf32, #tpu.memory_space<vmem>>, vector<16x16xf32>
    tpu.vector_store %arg4[%c8, %c8_10], %7 {strides = array<i32>} : memref<32x128xf32, #tpu.memory_space<vmem>>, vector<16x16xf32>,
    %cst_11 = arith.constant 0xFF800000 : f32
    %9 = vector.broadcast %cst_11 : f32 to vector<8x128xf32>
    %c24_12 = arith.constant 24 : index
    %c0_13 = arith.constant 0 : index
    %10 = vector.load %arg4[%c24_12, %c0_13] : memref<32x128xf32, #tpu.memory_space<vmem>>, vector<8x128xf32>
    tpu.vector_store %arg4[%c24_12, %c0_13], %9 {strides = array<i32>} : memref<32x128xf32, #tpu.memory_space<vmem>>, vector<8x128xf32>,
    %c0_14 = arith.constant 0 : index
    %c0_15 = arith.constant 0 : index
    %11 = vector.load %arg4[%c0_14, %c0_15] : memref<32x128xf32, #tpu.memory_space<vmem>>, vector<32x128xf32>
    %c1_i32 = arith.constant 1 : i32
    %12 = tpu.dynamic_rotate %11 by %c1_i32 dim 1 : vector<32x128xf32>, i32 -> vector<32x128xf32>
    %13 = arith.maximumf %12, %11 : vector<32x128xf32>
    %c127_i32 = arith.constant 127 : i32
    %14 = tpu.dynamic_rotate %11 by %c127_i32 dim 1 : vector<32x128xf32>, i32 -> vector<32x128xf32>
    %15 = arith.maximumf %13, %14 : vector<32x128xf32>
    %c1_i32_16 = arith.constant 1 : i32
    %16 = tpu.dynamic_rotate %15 by %c1_i32_16 dim 0 : vector<32x128xf32>, i32 -> vector<32x128xf32>
    %17 = arith.maximumf %16, %15 : vector<32x128xf32>
    %c31_i32 = arith.constant 31 : i32
    %18 = tpu.dynamic_rotate %15 by %c31_i32 dim 0 : vector<32x128xf32>, i32 -> vector<32x128xf32>
    %19 = arith.maximumf %17, %18 : vector<32x128xf32>
    %c0_17 = arith.constant 0 : index
    %c0_18 = arith.constant 0 : index
    %20 = vector.load %arg5[%c0_17, %c0_18] : memref<32x128xf32, #tpu.memory_space<vmem>>, vector<32x128xf32>
    tpu.vector_store %arg5[%c0_17, %c0_18], %19 {strides = array<i32>} : memref<32x128xf32, #tpu.memory_space<vmem>>, vector<32x128xf32>,
    %c8_19 = arith.constant 8 : index
    %c8_20 = arith.constant 8 : index
    %21 = vector.load %arg5[%c8_19, %c8_20] : memref<32x128xf32, #tpu.memory_space<vmem>>, vector<16x16xf32>
    %c0_21 = arith.constant 0 : index
    %c0_22 = arith.constant 0 : index
    %c0_23 = arith.constant 0 : index
    %c0_24 = arith.constant 0 : index
    %22 = vector.load %arg1[%c0_21, %c0_22, %c0_23, %c0_24] : memref<1x1x16x16xf32, #tpu.memory_space<vmem>>, vector<1x1x16x16xf32>
    %23 = vector.shape_cast %22 : vector<1x1x16x16xf32> to vector<16x16xf32>
    %c0_25 = arith.constant 0 : index
    %c0_26 = arith.constant 0 : index
    %c0_27 = arith.constant 0 : index
    %c0_28 = arith.constant 0 : index
    %24 = vector.load %arg2[%c0_25, %c0_26, %c0_27, %c0_28] : memref<1x4x16x16xf32, #tpu.memory_space<vmem>>, vector<1x1x16x16xf32>
    %25 = vector.shape_cast %24 : vector<1x1x16x16xf32> to vector<16x16xf32>
    %26 = arith.cmpf oeq, %21, %23 : vector<16x16xf32>
    %cst_29 = arith.constant 0.000000e+00 : f32
    %27 = vector.broadcast %cst_29 : f32 to vector<16x16xf32>
    %28 = arith.select %26, %25, %27 : vector<16x16xi1>, vector<16x16xf32>
    %c0_30 = arith.constant 0 : index
    %c0_31 = arith.constant 0 : index
    %c0_32 = arith.constant 0 : index
    %c0_33 = arith.constant 0 : index
    %29 = vector.load %arg3[%c0_30, %c0_31, %c0_32, %c0_33] : memref<1x1x16x16xf32, #tpu.memory_space<vmem>>, vector<1x1x16x16xf32>
    %30 = vector.shape_cast %29 : vector<1x1x16x16xf32> to vector<16x16xf32>
    %31 = vector.shape_cast %28 : vector<16x16xf32> to vector<1x1x16x16xf32>
    tpu.vector_store %arg3[%c0_30, %c0_31, %c0_32, %c0_33], %31 {strides = array<i32>} : memref<1x1x16x16xf32, #tpu.memory_space<vmem>>, vector<1x1x16x16xf32>,
    %c0_34 = arith.constant 0 : index
    %c0_35 = arith.constant 0 : index
    %32 = vector.load %arg5[%c0_34, %c0_35] : memref<32x128xf32, #tpu.memory_space<vmem>>, vector<32x128xf32>
    %c1_i32_36 = arith.constant 1 : i32
    %33 = tpu.dynamic_rotate %32 by %c1_i32_36 dim 1 : vector<32x128xf32>, i32 -> vector<32x128xf32>
    %c127_i32_37 = arith.constant 127 : i32
    %34 = tpu.dynamic_rotate %32 by %c127_i32_37 dim 1 : vector<32x128xf32>, i32 -> vector<32x128xf32>
    %35 = arith.maximumf %33, %34 : vector<32x128xf32>
    %c1_i32_38 = arith.constant 1 : i32
    %36 = tpu.dynamic_rotate %35 by %c1_i32_38 dim 0 : vector<32x128xf32>, i32 -> vector<32x128xf32>
    %c31_i32_39 = arith.constant 31 : i32
    %37 = tpu.dynamic_rotate %35 by %c31_i32_39 dim 0 : vector<32x128xf32>, i32 -> vector<32x128xf32>
    %38 = arith.maximumf %36, %37 : vector<32x128xf32>
    %c0_40 = arith.constant 0 : index
    %c0_41 = arith.constant 0 : index
    %39 = vector.load %arg4[%c0_40, %c0_41] : memref<32x128xf32, #tpu.memory_space<vmem>>, vector<32x128xf32>
    tpu.vector_store %arg4[%c0_40, %c0_41], %38 {strides = array<i32>} : memref<32x128xf32, #tpu.memory_space<vmem>>, vector<32x128xf32>,
    %c8_42 = arith.constant 8 : index
    %c8_43 = arith.constant 8 : index
    %40 = vector.load %arg4[%c8_42, %c8_43] : memref<32x128xf32, #tpu.memory_space<vmem>>, vector<16x16xf32>
    %c0_44 = arith.constant 0 : index
    %c0_45 = arith.constant 0 : index
    %c0_46 = arith.constant 0 : index
    %c0_47 = arith.constant 0 : index
    %41 = vector.load %arg1[%c0_44, %c0_45, %c0_46, %c0_47] : memref<1x1x16x16xf32, #tpu.memory_space<vmem>>, vector<1x1x16x16xf32>
    %42 = vector.shape_cast %41 : vector<1x1x16x16xf32> to vector<16x16xf32>
    %c0_48 = arith.constant 0 : index
    %c1 = arith.constant 1 : index
    %c0_49 = arith.constant 0 : index
    %c0_50 = arith.constant 0 : index
    %43 = vector.load %arg2[%c0_48, %c1, %c0_49, %c0_50] : memref<1x4x16x16xf32, #tpu.memory_space<vmem>>, vector<1x1x16x16xf32>
    %44 = vector.shape_cast %43 : vector<1x1x16x16xf32> to vector<16x16xf32>
    %45 = arith.cmpf oeq, %40, %42 : vector<16x16xf32>
    %cst_51 = arith.constant 0.000000e+00 : f32
    %46 = vector.broadcast %cst_51 : f32 to vector<16x16xf32>
    %47 = arith.select %45, %44, %46 : vector<16x16xi1>, vector<16x16xf32>
    %c0_52 = arith.constant 0 : index
    %c0_53 = arith.constant 0 : index
    %c0_54 = arith.constant 0 : index
    %c0_55 = arith.constant 0 : index
    %48 = vector.load %arg3[%c0_52, %c0_53, %c0_54, %c0_55] : memref<1x1x16x16xf32, #tpu.memory_space<vmem>>, vector<1x1x16x16xf32>
    %49 = vector.shape_cast %48 : vector<1x1x16x16xf32> to vector<16x16xf32>
    %50 = arith.addf %49, %47 : vector<16x16xf32>
    %c0_56 = arith.constant 0 : index
    %c0_57 = arith.constant 0 : index
    %c0_58 = arith.constant 0 : index
    %c0_59 = arith.constant 0 : index
    %51 = vector.load %arg3[%c0_56, %c0_57, %c0_58, %c0_59] : memref<1x1x16x16xf32, #tpu.memory_space<vmem>>, vector<1x1x16x16xf32>
    %52 = vector.shape_cast %51 : vector<1x1x16x16xf32> to vector<16x16xf32>
    %53 = vector.shape_cast %50 : vector<16x16xf32> to vector<1x1x16x16xf32>
    tpu.vector_store %arg3[%c0_56, %c0_57, %c0_58, %c0_59], %53 {strides = array<i32>} : memref<1x1x16x16xf32, #tpu.memory_space<vmem>>, vector<1x1x16x16xf32>,
    %c0_60 = arith.constant 0 : index
    %c0_61 = arith.constant 0 : index
    %54 = vector.load %arg4[%c0_60, %c0_61] : memref<32x128xf32, #tpu.memory_space<vmem>>, vector<32x128xf32>
    %c2_i32 = arith.constant 2 : i32
    %55 = tpu.dynamic_rotate %54 by %c2_i32 dim 1 : vector<32x128xf32>, i32 -> vector<32x128xf32>
    %c126_i32 = arith.constant 126 : i32
    %56 = tpu.dynamic_rotate %54 by %c126_i32 dim 1 : vector<32x128xf32>, i32 -> vector<32x128xf32>
    %57 = arith.maximumf %55, %56 : vector<32x128xf32>
    %c2_i32_62 = arith.constant 2 : i32
    %58 = tpu.dynamic_rotate %57 by %c2_i32_62 dim 0 : vector<32x128xf32>, i32 -> vector<32x128xf32>
    %c30_i32 = arith.constant 30 : i32
    %59 = tpu.dynamic_rotate %57 by %c30_i32 dim 0 : vector<32x128xf32>, i32 -> vector<32x128xf32>
    %60 = arith.maximumf %58, %59 : vector<32x128xf32>
    %c0_63 = arith.constant 0 : index
    %c0_64 = arith.constant 0 : index
    %61 = vector.load %arg5[%c0_63, %c0_64] : memref<32x128xf32, #tpu.memory_space<vmem>>, vector<32x128xf32>
    tpu.vector_store %arg5[%c0_63, %c0_64], %60 {strides = array<i32>} : memref<32x128xf32, #tpu.memory_space<vmem>>, vector<32x128xf32>,
    %c8_65 = arith.constant 8 : index
    %c8_66 = arith.constant 8 : index
    %62 = vector.load %arg5[%c8_65, %c8_66] : memref<32x128xf32, #tpu.memory_space<vmem>>, vector<16x16xf32>
    %c0_67 = arith.constant 0 : index
    %c0_68 = arith.constant 0 : index
    %c0_69 = arith.constant 0 : index
    %c0_70 = arith.constant 0 : index
    %63 = vector.load %arg1[%c0_67, %c0_68, %c0_69, %c0_70] : memref<1x1x16x16xf32, #tpu.memory_space<vmem>>, vector<1x1x16x16xf32>
    %64 = vector.shape_cast %63 : vector<1x1x16x16xf32> to vector<16x16xf32>
    %c0_71 = arith.constant 0 : index
    %c2 = arith.constant 2 : index
    %c0_72 = arith.constant 0 : index
    %c0_73 = arith.constant 0 : index
    %65 = vector.load %arg2[%c0_71, %c2, %c0_72, %c0_73] : memref<1x4x16x16xf32, #tpu.memory_space<vmem>>, vector<1x1x16x16xf32>
    %66 = vector.shape_cast %65 : vector<1x1x16x16xf32> to vector<16x16xf32>
    %67 = arith.cmpf oeq, %62, %64 : vector<16x16xf32>
    %cst_74 = arith.constant 0.000000e+00 : f32
    %68 = vector.broadcast %cst_74 : f32 to vector<16x16xf32>
    %69 = arith.select %67, %66, %68 : vector<16x16xi1>, vector<16x16xf32>
    %c0_75 = arith.constant 0 : index
    %c0_76 = arith.constant 0 : index
    %c0_77 = arith.constant 0 : index
    %c0_78 = arith.constant 0 : index
    %70 = vector.load %arg3[%c0_75, %c0_76, %c0_77, %c0_78] : memref<1x1x16x16xf32, #tpu.memory_space<vmem>>, vector<1x1x16x16xf32>
    %71 = vector.shape_cast %70 : vector<1x1x16x16xf32> to vector<16x16xf32>
    %72 = arith.addf %71, %69 : vector<16x16xf32>
    %c0_79 = arith.constant 0 : index
    %c0_80 = arith.constant 0 : index
    %c0_81 = arith.constant 0 : index
    %c0_82 = arith.constant 0 : index
    %73 = vector.load %arg3[%c0_79, %c0_80, %c0_81, %c0_82] : memref<1x1x16x16xf32, #tpu.memory_space<vmem>>, vector<1x1x16x16xf32>
    %74 = vector.shape_cast %73 : vector<1x1x16x16xf32> to vector<16x16xf32>
    %75 = vector.shape_cast %72 : vector<16x16xf32> to vector<1x1x16x16xf32>
    tpu.vector_store %arg3[%c0_79, %c0_80, %c0_81, %c0_82], %75 {strides = array<i32>} : memref<1x1x16x16xf32, #tpu.memory_space<vmem>>, vector<1x1x16x16xf32>,
    %c0_83 = arith.constant 0 : index
    %c0_84 = arith.constant 0 : index
    %76 = vector.load %arg5[%c0_83, %c0_84] : memref<32x128xf32, #tpu.memory_space<vmem>>, vector<32x128xf32>
    %c3_i32 = arith.constant 3 : i32
    %77 = tpu.dynamic_rotate %76 by %c3_i32 dim 1 : vector<32x128xf32>, i32 -> vector<32x128xf32>
    %c125_i32 = arith.constant 125 : i32
    %78 = tpu.dynamic_rotate %76 by %c125_i32 dim 1 : vector<32x128xf32>, i32 -> vector<32x128xf32>
    %79 = arith.maximumf %77, %78 : vector<32x128xf32>
    %c3_i32_85 = arith.constant 3 : i32
    %80 = tpu.dynamic_rotate %79 by %c3_i32_85 dim 0 : vector<32x128xf32>, i32 -> vector<32x128xf32>
    %c29_i32 = arith.constant 29 : i32
    %81 = tpu.dynamic_rotate %79 by %c29_i32 dim 0 : vector<32x128xf32>, i32 -> vector<32x128xf32>
    %82 = arith.maximumf %80, %81 : vector<32x128xf32>
    %c0_86 = arith.constant 0 : index
    %c0_87 = arith.constant 0 : index
    %83 = vector.load %arg4[%c0_86, %c0_87] : memref<32x128xf32, #tpu.memory_space<vmem>>, vector<32x128xf32>
    tpu.vector_store %arg4[%c0_86, %c0_87], %82 {strides = array<i32>} : memref<32x128xf32, #tpu.memory_space<vmem>>, vector<32x128xf32>,
    %c8_88 = arith.constant 8 : index
    %c8_89 = arith.constant 8 : index
    %84 = vector.load %arg4[%c8_88, %c8_89] : memref<32x128xf32, #tpu.memory_space<vmem>>, vector<16x16xf32>
    %c0_90 = arith.constant 0 : index
    %c0_91 = arith.constant 0 : index
    %c0_92 = arith.constant 0 : index
    %c0_93 = arith.constant 0 : index
    %85 = vector.load %arg1[%c0_90, %c0_91, %c0_92, %c0_93] : memref<1x1x16x16xf32, #tpu.memory_space<vmem>>, vector<1x1x16x16xf32>
    %86 = vector.shape_cast %85 : vector<1x1x16x16xf32> to vector<16x16xf32>
    %c0_94 = arith.constant 0 : index
    %c3 = arith.constant 3 : index
    %c0_95 = arith.constant 0 : index
    %c0_96 = arith.constant 0 : index
    %87 = vector.load %arg2[%c0_94, %c3, %c0_95, %c0_96] : memref<1x4x16x16xf32, #tpu.memory_space<vmem>>, vector<1x1x16x16xf32>
    %88 = vector.shape_cast %87 : vector<1x1x16x16xf32> to vector<16x16xf32>
    %89 = arith.cmpf oeq, %84, %86 : vector<16x16xf32>
    %cst_97 = arith.constant 0.000000e+00 : f32
    %90 = vector.broadcast %cst_97 : f32 to vector<16x16xf32>
    %91 = arith.select %89, %88, %90 : vector<16x16xi1>, vector<16x16xf32>
    %c0_98 = arith.constant 0 : index
    %c0_99 = arith.constant 0 : index
    %c0_100 = arith.constant 0 : index
    %c0_101 = arith.constant 0 : index
    %92 = vector.load %arg3[%c0_98, %c0_99, %c0_100, %c0_101] : memref<1x1x16x16xf32, #tpu.memory_space<vmem>>, vector<1x1x16x16xf32>
    %93 = vector.shape_cast %92 : vector<1x1x16x16xf32> to vector<16x16xf32>
    %94 = arith.addf %93, %91 : vector<16x16xf32>
    %c0_102 = arith.constant 0 : index
    %c0_103 = arith.constant 0 : index
    %c0_104 = arith.constant 0 : index
    %c0_105 = arith.constant 0 : index
    %95 = vector.load %arg3[%c0_102, %c0_103, %c0_104, %c0_105] : memref<1x1x16x16xf32, #tpu.memory_space<vmem>>, vector<1x1x16x16xf32>
    %96 = vector.shape_cast %95 : vector<1x1x16x16xf32> to vector<16x16xf32>
    %97 = vector.shape_cast %94 : vector<16x16xf32> to vector<1x1x16x16xf32>
    tpu.vector_store %arg3[%c0_102, %c0_103, %c0_104, %c0_105], %97 {strides = array<i32>} : memref<1x1x16x16xf32, #tpu.memory_space<vmem>>, vector<1x1x16x16xf32>,
    return
  }
  func.func @transform_0(%arg0: i32) -> (i32, i32, i32, i32) {
    %c0_i32 = arith.constant 0 : i32
    %c0_i32_0 = arith.constant 0 : i32
    %c0_i32_1 = arith.constant 0 : i32
    %c0_i32_2 = arith.constant 0 : i32
    return %arg0, %c0_i32, %c0_i32_0, %c0_i32_1 : i32, i32, i32, i32
  }
  func.func @transform_1(%arg0: i32) -> (i32, i32, i32, i32) {
    %c0_i32 = arith.constant 0 : i32
    %c0_i32_0 = arith.constant 0 : i32
    %c0_i32_1 = arith.constant 0 : i32
    %c0_i32_2 = arith.constant 0 : i32
    return %arg0, %c0_i32, %c0_i32_0, %c0_i32_1 : i32, i32, i32, i32
  }
  func.func @transform_2(%arg0: i32) -> (i32, i32, i32, i32) {
    %c0_i32 = arith.constant 0 : i32
    %c0_i32_0 = arith.constant 0 : i32
    %c0_i32_1 = arith.constant 0 : i32
    %c0_i32_2 = arith.constant 0 : i32
    return %arg0, %c0_i32, %c0_i32_0, %c0_i32_1 : i32, i32, i32, i32
  }
}

</mosaic_0001>

<llo_original>
// kernel: tpu_custom_call.1
$region0: #{tpu_custom_call.1}
  #allocation0 [shape = 'u32[]', space=smem, size = 0x4, offset = 0x4, fixed_abs, tag = 'smem constant byte address 0x4 - core index']
  #allocation1 [shape = 'u32[144,128]{1,0:T(1,128)}', space=vmem, size = 0x12000, scoped, tag = 'internal scratch']
  #allocation2 [shape = 'f32[32,128]{1,0:T(8,128)}', space=vmem, size = 0x4000, scoped, tag = 'scratch operand']
  #allocation3 [shape = 'f32[32,128]{1,0:T(8,128)}', space=vmem, size = 0x4000, scoped, tag = 'scratch operand']
  %s0 = inlined_call_operand.hbm [shape: f32[2,1,16,16], index: 0, kind: input, shape index: {}]
  %s1 = inlined_call_operand.hbm [shape: f32[2,4,16,16], index: 1, kind: input, shape index: {}]
  %s2 = inlined_call_operand.hbm [shape: f32[2,1,16,16], index: 2, kind: output, shape index: {}]
  %s3 = sld [smem:[#allocation0]]
  $region49: #{tpu_custom_call.1} parent=0
    _
  %s5 = ssub.s32 1, %s3
  %s6 = scalar_select 0, %s5, %s3
  $region1: #{tpu_custom_call.1} parent=0
    #allocation4 [shape = 'u8[16384]{0}', space=vmem, size = 0x4000, scoped, tag = 'input window, operand 0']
    #allocation5 [shape = 's32[2]{0}', space=sflag, size = 0x8, scoped, tag = 'scoped memory for tpu_custom_call.1']
    #allocation6 [shape = 's32[2]{0}', space=sflag, size = 0x8, scoped, tag = 'scoped memory for tpu_custom_call.1']
    #allocation7 [shape = 'u8[65536]{0}', space=vmem, size = 0x10000, scoped, tag = 'input window, operand 1']
    #allocation8 [shape = 's32[2]{0}', space=sflag, size = 0x8, scoped, tag = 'scoped memory for tpu_custom_call.1']
    #allocation9 [shape = 'u8[16384]{0}', space=vmem, size = 0x4000, scoped, tag = 'output window, operand 0']
    %7 = vsyncpa [#allocation5], 0
    %s8 = scalar_lea.sflag [#allocation5], 1
    %9 = vsyncpa %s8, 0
    %10 = vsyncpa [#allocation8], 0
    %s11 = scalar_lea.sflag [#allocation8], 1
    %12 = vsyncpa %s11, 0
    %13 = vsyncpa [#allocation6], 0
    %s14 = scalar_lea.sflag [#allocation6], 1
    %15 = vsyncpa %s14, 0
    loop: start=0, step=1, limit=4
    $region2: #{tpu_custom_call.1} parent=1 // loop_pre_header
      _
    $region3: #{tpu_custom_call.1} parent=1 // loop_header
      %s17 = sphi 0, %s21
      %p18 = scmp.ge.s32.totalorder %s17, 4
      %s27 = sphi 0, %s29
      %s30 = sphi 0, %s27
      %s31 = sphi 0, %s30
      %s47 = sphi 0, %s31
      %s53 = sphi 0, %s55
      %s56 = sphi 0, %s53
      %s57 = sphi 0, %s56
      %s73 = sphi 0, %s57
      %s79 = sphi 0, %s81
      %s82 = sphi 0, %s79
      %s83 = sphi 0, %s82
      %s99 = sphi 0, %s83
    $region4: #{tpu_custom_call.1} parent=1 // loop_header_branch
      %20 = sbr.rel (%p18) target = $region8
    $region5: #{tpu_custom_call.1} parent=1 // loop_body
      %s22 = ssub.s32 %s17, 1
      %s23 = ssub.s32 %s17, 2
      %s24 = sadd.s32 %s17, 1
      %s25 = ssub.s32 %s17, %s24
      %p26 = scmp.eq.s32.totalorder %s25, 0
      %s28 = sadd.s32 %s27, 1
      %s29 = scalar_select %p26, %s27, %s28
      %p32 = pneg %p26
      %p33 = scmp.eq.s32.totalorder %s17, 1
      %p34 = por %p32, %p33
      %p35 = scmp.ne.s32.totalorder %s27, %s30
      %p36 = scmp.eq.s32.totalorder %s17, 0
      %p37 = por %p35, %p36
      %p38 = scmp.ne.s32.totalorder %s27, %s30
      %p39 = scmp.eq.s32.totalorder %s22, 1
      %p40 = por %p38, %p39
      %p41 = scmp.ne.s32.totalorder %s30, %s31
      %p42 = scmp.eq.s32.totalorder %s22, 0
      %p43 = por %p41, %p42
      %p44 = scmp.ne.s32.totalorder %s30, %s31
      %p45 = scmp.eq.s32.totalorder %s23, 1
      %p46 = por %p44, %p45
      %p48 = scmp.ne.s32.totalorder %s31, %s47
      %p49 = scmp.eq.s32.totalorder %s23, 0
      %p50 = por %p48, %p49
      %s51 = ssub.s32 %s17, %s24
      %p52 = scmp.eq.s32.totalorder %s51, 0
      %s54 = sadd.s32 %s53, 1
      %s55 = scalar_select %p52, %s53, %s54
      %p58 = pneg %p52
      %p59 = scmp.eq.s32.totalorder %s17, 1
      %p60 = por %p58, %p59
      %p61 = scmp.ne.s32.totalorder %s53, %s56
      %p62 = scmp.eq.s32.totalorder %s17, 0
      %p63 = por %p61, %p62
      %p64 = scmp.ne.s32.totalorder %s53, %s56
      %p65 = scmp.eq.s32.totalorder %s22, 1
      %p66 = por %p64, %p65
      %p67 = scmp.ne.s32.totalorder %s56, %s57
      %p68 = scmp.eq.s32.totalorder %s22, 0
      %p69 = por %p67, %p68
      %p70 = scmp.ne.s32.totalorder %s56, %s57
      %p71 = scmp.eq.s32.totalorder %s23, 1
      %p72 = por %p70, %p71
      %p74 = scmp.ne.s32.totalorder %s57, %s73
      %p75 = scmp.eq.s32.totalorder %s23, 0
      %p76 = por %p74, %p75
      %s77 = ssub.s32 %s17, %s24
      %p78 = scmp.eq.s32.totalorder %s77, 0
      %s80 = sadd.s32 %s79, 1
      %s81 = scalar_select %p78, %s79, %s80
      %p84 = pneg %p78
      %p85 = scmp.eq.s32.totalorder %s17, 1
      %p86 = por %p84, %p85
      %p87 = scmp.ne.s32.totalorder %s79, %s82
      %p88 = scmp.eq.s32.totalorder %s17, 0
      %p89 = por %p87, %p88
      %p90 = scmp.ne.s32.totalorder %s79, %s82
      %p91 = scmp.eq.s32.totalorder %s22, 1
      %p92 = por %p90, %p91
      %p93 = scmp.ne.s32.totalorder %s82, %s83
      %p94 = scmp.eq.s32.totalorder %s22, 0
      %p95 = por %p93, %p94
      %p96 = scmp.ne.s32.totalorder %s82, %s83
      %p97 = scmp.eq.s32.totalorder %s23, 1
      %p98 = por %p96, %p97
      %p100 = scmp.ne.s32.totalorder %s83, %s99
      %p101 = scmp.eq.s32.totalorder %s23, 0
      %p102 = por %p100, %p101
      %p103 = scmp.le.s32.totalorder 1, %s17
      %p104 = scmp.lt.s32.totalorder %s17, 3
      %p105 = pnand %p103, %p104
      %p106 = pneg %p105
      // Predicated region
      $region9: #{tpu_custom_call.1} parent=5 // pred_check
        _
      $region10: #{tpu_custom_call.1} parent=5 // pred_check_branch
        %108 = sbr.rel (%p105) target = $region12
      $region11: #{tpu_custom_call.1} parent=5 // pred_region
        %s109 = ssub.s32 %s17, 1
      $region12: #{tpu_custom_call.1} parent=5 // pred_fallthru
        _
      %p110 = scmp.lt.s32.totalorder %s17, 2
      // Predicated region
      $region13: #{tpu_custom_call.1} parent=5 // pred_check
        %p111 = pneg %p110
      $region14: #{tpu_custom_call.1} parent=5 // pred_check_branch
        %113 = sbr.rel (%p111) target = $region16
      $region15: #{tpu_custom_call.1} parent=5 // pred_region
        // Predicated region
        $region17: #{tpu_custom_call.1} parent=15 // pred_check
          %p114 = pneg %p37
        $region18: #{tpu_custom_call.1} parent=15 // pred_check_branch
          %116 = sbr.rel (%p114) target = $region20
        $region19: #{tpu_custom_call.1} parent=15 // pred_region
          %s117 = sand.u32 %s27, 1
          %s118 = scalar_lea.sflag [#allocation5], %s117
          %s119 = sand.u32 %s27, 1
          %s120 = smul.addr %s119, 16
          %s121 = scalar_lea.vmem [#allocation4], %s120
          %s123 = ssub.s32 256, 256
          %124 = vsyncadd %s118, %s123
          %s125 = smul.addr %s17, 2
          %s126 = smul.addr %s125, 128
          %s127 = scalar_lea.hbm %s0, %s126
          %s128 = sshll.u32 %s121, 4
          %s129 = int_to_ptr.vmem [resolvable:$true] %s128
          %134 = dma.hbm_to_vmem [thread:$0]  %s127, 256, %s129, %s118, 128, 128, 8
        $region20: #{tpu_custom_call.1} parent=15 // pred_fallthru
          _
        // Predicated region
        $region21: #{tpu_custom_call.1} parent=15 // pred_check
          %p135 = pneg %p63
        $region22: #{tpu_custom_call.1} parent=15 // pred_check_branch
          %137 = sbr.rel (%p135) target = $region24
        $region23: #{tpu_custom_call.1} parent=15 // pred_region
          %s138 = sand.u32 %s53, 1
          %s139 = scalar_lea.sflag [#allocation8], %s138
          %s140 = sand.u32 %s53, 1
          %s141 = smul.addr %s140, 64
          %s142 = scalar_lea.vmem [#allocation7], %s141
          %s144 = ssub.s32 1024, 1024
          %145 = vsyncadd %s139, %s144
          %s146 = smul.addr %s17, 8
          %s147 = smul.addr %s146, 128
          %s148 = scalar_lea.hbm %s1, %s147
          %s149 = sshll.u32 %s142, 4
          %s150 = int_to_ptr.vmem [resolvable:$true] %s149
          %155 = dma.hbm_to_vmem [thread:$0]  %s148, 1024, %s150, %s139, 128, 128, 8
        $region24: #{tpu_custom_call.1} parent=15 // pred_fallthru
          _
      $region16: #{tpu_custom_call.1} parent=5 // pred_fallthru
        _
      %p156 = scmp.le.s32.totalorder 1, %s17
      %p157 = scmp.lt.s32.totalorder %s17, 3
      %p158 = pnand %p156, %p157
      %p159 = pneg %p158
      // Predicated region
      $region25: #{tpu_custom_call.1} parent=5 // pred_check
        _
      $region26: #{tpu_custom_call.1} parent=5 // pred_check_branch
        %161 = sbr.rel (%p158) target = $region28
      $region27: #{tpu_custom_call.1} parent=5 // pred_region
        %s162 = ssub.s32 %s17, 1
        %s163 = sand.u32 %s30, 1
        %s164 = scalar_lea.sflag [#allocation5], %s163
        %s165 = sand.u32 %s30, 1
        %s166 = smul.addr %s165, 16
        %s167 = scalar_lea.vmem [#allocation4], %s166
        // Predicated region
        $region29: #{tpu_custom_call.1} parent=27 // pred_check
          %p168 = pneg %p43
        $region30: #{tpu_custom_call.1} parent=27 // pred_check_branch
          %170 = sbr.rel (%p168) target = $region32
        $region31: #{tpu_custom_call.1} parent=27 // pred_region
          %171 = dma.done %s164, 256
        $region32: #{tpu_custom_call.1} parent=27 // pred_fallthru
          _
        %s172 = sand.u32 %s56, 1
        %s173 = scalar_lea.sflag [#allocation8], %s172
        %s174 = sand.u32 %s56, 1
        %s175 = smul.addr %s174, 64
        %s176 = scalar_lea.vmem [#allocation7], %s175
        // Predicated region
        $region33: #{tpu_custom_call.1} parent=27 // pred_check
          %p177 = pneg %p69
        $region34: #{tpu_custom_call.1} parent=27 // pred_check_branch
          %179 = sbr.rel (%p177) target = $region36
        $region35: #{tpu_custom_call.1} parent=27 // pred_region
          %180 = dma.done %s173, 1024
        $region36: #{tpu_custom_call.1} parent=27 // pred_fallthru
          _
        %s181 = sand.u32 %s30, 1
        %s182 = scalar_lea.sflag [#allocation5], %s181
        %s183 = sand.u32 %s30, 1
        %s184 = smul.addr %s183, 16
        %s185 = scalar_lea.vmem [#allocation4], %s184
        %p186 = pneg %p43
        %p187 = pneg %p40
        %s188 = sand.u32 %s56, 1
        %s189 = scalar_lea.sflag [#allocation8], %s188
        %s190 = sand.u32 %s56, 1
        %s191 = smul.addr %s190, 64
        %s192 = scalar_lea.vmem [#allocation7], %s191
        %p193 = pneg %p69
        %p194 = pneg %p66
        %p195 = pneg %p95
        %p196 = pneg %p92
        %s197 = sand.u32 %s82, 1
        %s198 = scalar_lea.sflag [#allocation6], %s197
        %s199 = sand.u32 %s82, 1
        %s200 = smul.addr %s199, 16
        %s201 = scalar_lea.vmem [#allocation9], %s200
        %202 = vst [vmem:[#allocation2] sm:$0xff] -inf
        %vm203 = vcmask 64512
        %204 = vst.msk [vmem:[#allocation2] sm:$0xff] %vm203, -inf
        %205 = vst.msk [vmem:[#allocation2 + $0x8] sm:$0xff] %vm203, -inf
        %206 = vst.msk [vmem:[#allocation2 + $0x10] sm:$0xff] %vm203, -inf
        %207 = vst.msk [vmem:[#allocation2 + $0x18] sm:$0xff] %vm203, -inf
        %vm208 = vcmask 261312
        %209 = vst.msk [vmem:[#allocation2] sm:$0xff] %vm208, -inf
        %210 = vst.msk [vmem:[#allocation2 + $0x8] sm:$0xff] %vm208, -inf
        %211 = vst.msk [vmem:[#allocation2 + $0x10] sm:$0xff] %vm208, -inf
        %212 = vst.msk [vmem:[#allocation2 + $0x18] sm:$0xff] %vm208, -inf
        %v213 = vld [vmem:[%s167] sm:$0xff]
        %v214 = vld [vmem:[%s167 + $0x8] sm:$0xff]
        %217 = vrot.lane.b32.xlu0 %v213, 8
        %v218 = vpop.permute.xlu0 %217
        %219 = vrot.lane.b32.xlu0 %v214, 8
        %v220 = vpop.permute.xlu0 %219
        %vm223 = vcmask 195648
        %224 = vst.msk [vmem:[#allocation2 + $0x8] sm:$0xff] %vm223, %v218
        %225 = vst.msk [vmem:[#allocation2 + $0x10] sm:$0xff] %vm223, %v220
        %226 = vst [vmem:[#allocation2 + $0x18] sm:$0xff] -inf
        %v227 = vld [vmem:[#allocation2] sm:$0xff]
        %v228 = vld [vmem:[#allocation2 + $0x8] sm:$0xff]
        %v229 = vld [vmem:[#allocation2 + $0x10] sm:$0xff]
        %v230 = vld [vmem:[#allocation2 + $0x18] sm:$0xff]
        %231 = vrot.lane.b32.xlu0 %v227, 1
        %v232 = vpop.permute.xlu0 %231
        %233 = vrot.lane.b32.xlu0 %v228, 1
        %v234 = vpop.permute.xlu0 %233
        %235 = vrot.lane.b32.xlu0 %v229, 1
        %v236 = vpop.permute.xlu0 %235
        %237 = vrot.lane.b32.xlu0 %v230, 1
        %v238 = vpop.permute.xlu0 %237
        %v239 = vmax.f32 %v232, %v227
        %v240 = vmax.f32 %v234, %v228
        %v241 = vmax.f32 %v236, %v229
        %v242 = vmax.f32 %v238, %v230
        %243 = vrot.lane.b32.xlu0 %v227, 127
        %v244 = vpop.permute.xlu0 %243
        %245 = vrot.lane.b32.xlu0 %v228, 127
        %v246 = vpop.permute.xlu0 %245
        %247 = vrot.lane.b32.xlu0 %v229, 127
        %v248 = vpop.permute.xlu0 %247
        %249 = vrot.lane.b32.xlu0 %v230, 127
        %v250 = vpop.permute.xlu0 %249
        %v251 = vmax.f32 %v239, %v244
        %v252 = vmax.f32 %v240, %v246
        %v253 = vmax.f32 %v241, %v248
        %v254 = vmax.f32 %v242, %v250
        %v255 = vrot.slane %v251, 7
        %v256 = vrot.slane %v252, 7
        %v257 = vrot.slane %v253, 7
        %v258 = vrot.slane %v254, 7
        %v259 = vlaneseq
        %v260 = vshrl.u32 %v259, 7
        %vm261 = vcmp.lt.s32.totalorder %v260, 1
        %v262 = vsel %vm261, %v257, %v258
        %v263 = vsel %vm261, %v256, %v257
        %v264 = vsel %vm261, %v255, %v256
        %v265 = vsel %vm261, %v258, %v255
        %v266 = vmax.f32 %v265, %v251
        %v267 = vmax.f32 %v264, %v252
        %v268 = vmax.f32 %v263, %v253
        %v269 = vmax.f32 %v262, %v254
        %v270 = vrot.slane %v251, 1
        %v271 = vrot.slane %v252, 1
        %v272 = vrot.slane %v253, 1
        %v273 = vrot.slane %v254, 1
        %vm274 = vcmp.lt.s32.totalorder %v260, 7
        %v275 = vsel %vm274, %v272, %v273
        %v276 = vsel %vm274, %v271, %v272
        %v277 = vsel %vm274, %v270, %v271
        %v278 = vsel %vm274, %v273, %v270
        %v279 = vmax.f32 %v266, %v277
        %v280 = vmax.f32 %v267, %v276
        %v281 = vmax.f32 %v268, %v275
        %v282 = vmax.f32 %v269, %v278
        %283 = vst [vmem:[#allocation3] sm:$0xff] %v279
        %284 = vst [vmem:[#allocation3 + $0x8] sm:$0xff] %v280
        %285 = vst [vmem:[#allocation3 + $0x10] sm:$0xff] %v281
        %286 = vst [vmem:[#allocation3 + $0x18] sm:$0xff] %v282
        %v287 = vld [vmem:[#allocation3 + $0x8] sm:$0xff]
        %v288 = vld [vmem:[#allocation3 + $0x10] sm:$0xff]
        %v289 = vld [vmem:[%s167] sm:$0xff]
        %v290 = vld [vmem:[%s167 + $0x8] sm:$0xff]
        %v291 = vld [vmem:[%s176] sm:$0xff]
        %v292 = vld [vmem:[%s176 + $0x8] sm:$0xff]
        %295 = vrot.lane.b32.xlu0 %v289, 8
        %v296 = vpop.permute.xlu0 %295
        %297 = vrot.lane.b32.xlu0 %v290, 8
        %v298 = vpop.permute.xlu0 %297
        %vm301 = vcmp.eq.f32.partialorder %v287, %v296
        %vm302 = vcmp.eq.f32.partialorder %v288, %v298
        %305 = vrot.lane.b32.xlu0 %v291, 8
        %v306 = vpop.permute.xlu0 %305
        %307 = vrot.lane.b32.xlu0 %v292, 8
        %v308 = vpop.permute.xlu0 %307
        %v311 = vsel %vm301, %v306, 0.0
        %v312 = vsel %vm302, %v308, 0.0
        %315 = vrot.lane.b32.xlu0 %v311, 120
        %v316 = vpop.permute.xlu0 %315
        %317 = vrot.lane.b32.xlu0 %v312, 120
        %v318 = vpop.permute.xlu0 %317
        %vm321 = vcmask 130048
        %322 = vst.msk [vmem:[%s201] sm:$0xff] %vm321, %v316
        %323 = vst.msk [vmem:[%s201 + $0x8] sm:$0xff] %vm321, %v318
        %v324 = vld [vmem:[#allocation3] sm:$0xff]
        %v325 = vld [vmem:[#allocation3 + $0x8] sm:$0xff]
        %v326 = vld [vmem:[#allocation3 + $0x10] sm:$0xff]
        %v327 = vld [vmem:[#allocation3 + $0x18] sm:$0xff]
        %328 = vrot.lane.b32.xlu0 %v324, 1
        %v329 = vpop.permute.xlu0 %328
        %330 = vrot.lane.b32.xlu0 %v325, 1
        %v331 = vpop.permute.xlu0 %330
        %332 = vrot.lane.b32.xlu0 %v326, 1
        %v333 = vpop.permute.xlu0 %332
        %334 = vrot.lane.b32.xlu0 %v327, 1
        %v335 = vpop.permute.xlu0 %334
        %336 = vrot.lane.b32.xlu0 %v324, 127
        %v337 = vpop.permute.xlu0 %336
        %338 = vrot.lane.b32.xlu0 %v325, 127
        %v339 = vpop.permute.xlu0 %338
        %340 = vrot.lane.b32.xlu0 %v326, 127
        %v341 = vpop.permute.xlu0 %340
        %342 = vrot.lane.b32.xlu0 %v327, 127
        %v343 = vpop.permute.xlu0 %342
        %v344 = vmax.f32 %v329, %v337
        %v345 = vmax.f32 %v331, %v339
        %v346 = vmax.f32 %v333, %v341
        %v347 = vmax.f32 %v335, %v343
        %v348 = vrot.slane %v344, 7
        %v349 = vrot.slane %v345, 7
        %v350 = vrot.slane %v346, 7
        %v351 = vrot.slane %v347, 7
        %v352 = vsel %vm261, %v350, %v351
        %v353 = vsel %vm261, %v349, %v350
        %v354 = vsel %vm261, %v348, %v349
        %v355 = vsel %vm261, %v351, %v348
        %v356 = vrot.slane %v344, 1
        %v357 = vrot.slane %v345, 1
        %v358 = vrot.slane %v346, 1
        %v359 = vrot.slane %v347, 1
        %v360 = vsel %vm274, %v358, %v359
        %v361 = vsel %vm274, %v357, %v358
        %v362 = vsel %vm274, %v356, %v357
        %v363 = vsel %vm274, %v359, %v356
        %v364 = vmax.f32 %v355, %v362
        %v365 = vmax.f32 %v354, %v361
        %v366 = vmax.f32 %v353, %v360
        %v367 = vmax.f32 %v352, %v363
        %368 = vst [vmem:[#allocation2] sm:$0xff] %v364
        %369 = vst [vmem:[#allocation2 + $0x8] sm:$0xff] %v365
        %370 = vst [vmem:[#allocation2 + $0x10] sm:$0xff] %v366
        %371 = vst [vmem:[#allocation2 + $0x18] sm:$0xff] %v367
        %v372 = vld [vmem:[#allocation2 + $0x8] sm:$0xff]
        %v373 = vld [vmem:[#allocation2 + $0x10] sm:$0xff]
        %v374 = vld [vmem:[%s167] sm:$0xff]
        %v375 = vld [vmem:[%s167 + $0x8] sm:$0xff]
        %s376 = scalar_lea.vmem %s176, 16 [#allocation7]
        %v377 = vld [vmem:[%s376] sm:$0xff]
        %v378 = vld [vmem:[%s376 + $0x8] sm:$0xff]
        %381 = vrot.lane.b32.xlu0 %v374, 8
        %v382 = vpop.permute.xlu0 %381
        %383 = vrot.lane.b32.xlu0 %v375, 8
        %v384 = vpop.permute.xlu0 %383
        %vm387 = vcmp.eq.f32.partialorder %v372, %v382
        %vm388 = vcmp.eq.f32.partialorder %v373, %v384
        %391 = vrot.lane.b32.xlu0 %v377, 8
        %v392 = vpop.permute.xlu0 %391
        %393 = vrot.lane.b32.xlu0 %v378, 8
        %v394 = vpop.permute.xlu0 %393
        %v397 = vsel %vm387, %v392, 0.0
        %v398 = vsel %vm388, %v394, 0.0
        %v399 = vld [vmem:[%s201] sm:$0xff]
        %v400 = vld [vmem:[%s201 + $0x8] sm:$0xff]
        %403 = vrot.lane.b32.xlu0 %v397, 120
        %v404 = vpop.permute.xlu0 %403
        %405 = vrot.lane.b32.xlu0 %v398, 120
        %v406 = vpop.permute.xlu0 %405
        %v409 = vadd.f32 %v399, %v404
        %v410 = vadd.f32 %v400, %v406
        %411 = vst.msk [vmem:[%s201] sm:$0xff] %vm321, %v409
        %412 = vst.msk [vmem:[%s201 + $0x8] sm:$0xff] %vm321, %v410
        %v413 = vld [vmem:[#allocation2] sm:$0xff]
        %v414 = vld [vmem:[#allocation2 + $0x8] sm:$0xff]
        %v415 = vld [vmem:[#allocation2 + $0x10] sm:$0xff]
        %v416 = vld [vmem:[#allocation2 + $0x18] sm:$0xff]
        %417 = vrot.lane.b32.xlu0 %v413, 2
        %v418 = vpop.permute.xlu0 %417
        %419 = vrot.lane.b32.xlu0 %v414, 2
        %v420 = vpop.permute.xlu0 %419
        %421 = vrot.lane.b32.xlu0 %v415, 2
        %v422 = vpop.permute.xlu0 %421
        %423 = vrot.lane.b32.xlu0 %v416, 2
        %v424 = vpop.permute.xlu0 %423
        %425 = vrot.lane.b32.xlu0 %v413, 126
        %v426 = vpop.permute.xlu0 %425
        %427 = vrot.lane.b32.xlu0 %v414, 126
        %v428 = vpop.permute.xlu0 %427
        %429 = vrot.lane.b32.xlu0 %v415, 126
        %v430 = vpop.permute.xlu0 %429
        %431 = vrot.lane.b32.xlu0 %v416, 126
        %v432 = vpop.permute.xlu0 %431
        %v433 = vmax.f32 %v418, %v426
        %v434 = vmax.f32 %v420, %v428
        %v435 = vmax.f32 %v422, %v430
        %v436 = vmax.f32 %v424, %v432
        %v437 = vrot.slane %v433, 6
        %v438 = vrot.slane %v434, 6
        %v439 = vrot.slane %v435, 6
        %v440 = vrot.slane %v436, 6
        %vm441 = vcmp.lt.s32.totalorder %v260, 2
        %v442 = vsel %vm441, %v439, %v440
        %v443 = vsel %vm441, %v438, %v439
        %v444 = vsel %vm441, %v437, %v438
        %v445 = vsel %vm441, %v440, %v437
        %v446 = vrot.slane %v433, 2
        %v447 = vrot.slane %v434, 2
        %v448 = vrot.slane %v435, 2
        %v449 = vrot.slane %v436, 2
        %vm450 = vcmp.lt.s32.totalorder %v260, 6
        %v451 = vsel %vm450, %v448, %v449
        %v452 = vsel %vm450, %v447, %v448
        %v453 = vsel %vm450, %v446, %v447
        %v454 = vsel %vm450, %v449, %v446
        %v455 = vmax.f32 %v445, %v453
        %v456 = vmax.f32 %v444, %v452
        %v457 = vmax.f32 %v443, %v451
        %v458 = vmax.f32 %v442, %v454
        %459 = vst [vmem:[#allocation3] sm:$0xff] %v455
        %460 = vst [vmem:[#allocation3 + $0x8] sm:$0xff] %v456
        %461 = vst [vmem:[#allocation3 + $0x10] sm:$0xff] %v457
        %462 = vst [vmem:[#allocation3 + $0x18] sm:$0xff] %v458
        %v463 = vld [vmem:[#allocation3 + $0x8] sm:$0xff]
        %v464 = vld [vmem:[#allocation3 + $0x10] sm:$0xff]
        %v465 = vld [vmem:[%s167] sm:$0xff]
        %v466 = vld [vmem:[%s167 + $0x8] sm:$0xff]
        %s467 = scalar_lea.vmem %s176, 32 [#allocation7]
        %v468 = vld [vmem:[%s467] sm:$0xff]
        %v469 = vld [vmem:[%s467 + $0x8] sm:$0xff]
        %472 = vrot.lane.b32.xlu0 %v465, 8
        %v473 = vpop.permute.xlu0 %472
        %474 = vrot.lane.b32.xlu0 %v466, 8
        %v475 = vpop.permute.xlu0 %474
        %vm478 = vcmp.eq.f32.partialorder %v463, %v473
        %vm479 = vcmp.eq.f32.partialorder %v464, %v475
        %482 = vrot.lane.b32.xlu0 %v468, 8
        %v483 = vpop.permute.xlu0 %482
        %484 = vrot.lane.b32.xlu0 %v469, 8
        %v485 = vpop.permute.xlu0 %484
        %v488 = vsel %vm478, %v483, 0.0
        %v489 = vsel %vm479, %v485, 0.0
        %v490 = vld [vmem:[%s201] sm:$0xff]
        %v491 = vld [vmem:[%s201 + $0x8] sm:$0xff]
        %494 = vrot.lane.b32.xlu0 %v488, 120
        %v495 = vpop.permute.xlu0 %494
        %496 = vrot.lane.b32.xlu0 %v489, 120
        %v497 = vpop.permute.xlu0 %496
        %v500 = vadd.f32 %v490, %v495
        %v501 = vadd.f32 %v491, %v497
        %502 = vst.msk [vmem:[%s201] sm:$0xff] %vm321, %v500
        %503 = vst.msk [vmem:[%s201 + $0x8] sm:$0xff] %vm321, %v501
        %v504 = vld [vmem:[#allocation3] sm:$0xff]
        %v505 = vld [vmem:[#allocation3 + $0x8] sm:$0xff]
        %v506 = vld [vmem:[#allocation3 + $0x10] sm:$0xff]
        %v507 = vld [vmem:[#allocation3 + $0x18] sm:$0xff]
        %508 = vrot.lane.b32.xlu0 %v504, 3
        %v509 = vpop.permute.xlu0 %508
        %510 = vrot.lane.b32.xlu0 %v505, 3
        %v511 = vpop.permute.xlu0 %510
        %512 = vrot.lane.b32.xlu0 %v506, 3
        %v513 = vpop.permute.xlu0 %512
        %514 = vrot.lane.b32.xlu0 %v507, 3
        %v515 = vpop.permute.xlu0 %514
        %516 = vrot.lane.b32.xlu0 %v504, 125
        %v517 = vpop.permute.xlu0 %516
        %518 = vrot.lane.b32.xlu0 %v505, 125
        %v519 = vpop.permute.xlu0 %518
        %520 = vrot.lane.b32.xlu0 %v506, 125
        %v521 = vpop.permute.xlu0 %520
        %522 = vrot.lane.b32.xlu0 %v507, 125
        %v523 = vpop.permute.xlu0 %522
        %v524 = vmax.f32 %v509, %v517
        %v525 = vmax.f32 %v511, %v519
        %v526 = vmax.f32 %v513, %v521
        %v527 = vmax.f32 %v515, %v523
        %v528 = vrot.slane %v524, 5
        %v529 = vrot.slane %v525, 5
        %v530 = vrot.slane %v526, 5
        %v531 = vrot.slane %v527, 5
        %vm532 = vcmp.lt.s32.totalorder %v260, 3
        %v533 = vsel %vm532, %v530, %v531
        %v534 = vsel %vm532, %v529, %v530
        %v535 = vsel %vm532, %v528, %v529
        %v536 = vsel %vm532, %v531, %v528
        %v537 = vrot.slane %v524, 3
        %v538 = vrot.slane %v525, 3
        %v539 = vrot.slane %v526, 3
        %v540 = vrot.slane %v527, 3
        %vm541 = vcmp.lt.s32.totalorder %v260, 5
        %v542 = vsel %vm541, %v539, %v540
        %v543 = vsel %vm541, %v538, %v539
        %v544 = vsel %vm541, %v537, %v538
        %v545 = vsel %vm541, %v540, %v537
        %v546 = vmax.f32 %v536, %v544
        %v547 = vmax.f32 %v535, %v543
        %v548 = vmax.f32 %v534, %v542
        %v549 = vmax.f32 %v533, %v545
        %550 = vst [vmem:[#allocation2] sm:$0xff] %v546
        %551 = vst [vmem:[#allocation2 + $0x8] sm:$0xff] %v547
        %552 = vst [vmem:[#allocation2 + $0x10] sm:$0xff] %v548
        %553 = vst [vmem:[#allocation2 + $0x18] sm:$0xff] %v549
        %v554 = vld [vmem:[#allocation2 + $0x8] sm:$0xff]
        %v555 = vld [vmem:[#allocation2 + $0x10] sm:$0xff]
        %v556 = vld [vmem:[%s167] sm:$0xff]
        %v557 = vld [vmem:[%s167 + $0x8] sm:$0xff]
        %s558 = scalar_lea.vmem %s176, 48 [#allocation7]
        %v559 = vld [vmem:[%s558] sm:$0xff]
        %v560 = vld [vmem:[%s558 + $0x8] sm:$0xff]
        %563 = vrot.lane.b32.xlu0 %v556, 8
        %v564 = vpop.permute.xlu0 %563
        %565 = vrot.lane.b32.xlu0 %v557, 8
        %v566 = vpop.permute.xlu0 %565
        %vm569 = vcmp.eq.f32.partialorder %v554, %v564
        %vm570 = vcmp.eq.f32.partialorder %v555, %v566
        %573 = vrot.lane.b32.xlu0 %v559, 8
        %v574 = vpop.permute.xlu0 %573
        %575 = vrot.lane.b32.xlu0 %v560, 8
        %v576 = vpop.permute.xlu0 %575
        %v579 = vsel %vm569, %v574, 0.0
        %v580 = vsel %vm570, %v576, 0.0
        %v581 = vld [vmem:[%s201] sm:$0xff]
        %v582 = vld [vmem:[%s201 + $0x8] sm:$0xff]
        %585 = vrot.lane.b32.xlu0 %v579, 120
        %v586 = vpop.permute.xlu0 %585
        %587 = vrot.lane.b32.xlu0 %v580, 120
        %v588 = vpop.permute.xlu0 %587
        %v591 = vadd.f32 %v581, %v586
        %v592 = vadd.f32 %v582, %v588
        %593 = vst.msk [vmem:[%s201] sm:$0xff] %vm321, %v591
        %594 = vst.msk [vmem:[%s201 + $0x8] sm:$0xff] %vm321, %v592
        %s595 = sand.u32 %s82, 1
        %s596 = scalar_lea.sflag [#allocation6], %s595
        %s597 = sand.u32 %s82, 1
        %s598 = smul.addr %s597, 16
        %s599 = scalar_lea.vmem [#allocation9], %s598
        // Predicated region
        $region37: #{tpu_custom_call.1} parent=27 // pred_check
          %p600 = pneg %p92
        $region38: #{tpu_custom_call.1} parent=27 // pred_check_branch
          %602 = sbr.rel (%p600) target = $region40
        $region39: #{tpu_custom_call.1} parent=27 // pred_region
          %s604 = ssub.s32 256, 256
          %605 = vsyncadd %s596, %s604
          %s606 = smul.addr %s22, 2
          %s607 = smul.addr %s606, 128
          %s608 = scalar_lea.hbm %s2, %s607
          %s609 = sshll.u32 %s599, 4
          %s610 = int_to_ptr.vmem [resolvable:$true] %s609
          %615 = dma.vmem_to_hbm [thread:$0]  %s610, 256, %s608, %s596, 128, 128, 8
        $region40: #{tpu_custom_call.1} parent=27 // pred_fallthru
          _
      $region28: #{tpu_custom_call.1} parent=5 // pred_fallthru
        _
      %p616 = scmp.le.s32.totalorder 2, %s17
      // Predicated region
      $region41: #{tpu_custom_call.1} parent=5 // pred_check
        %p617 = pneg %p616
      $region42: #{tpu_custom_call.1} parent=5 // pred_check_branch
        %619 = sbr.rel (%p617) target = $region44
      $region43: #{tpu_custom_call.1} parent=5 // pred_region
        %s620 = ssub.s32 %s17, 2
        // Predicated region
        $region45: #{tpu_custom_call.1} parent=43 // pred_check
          %p621 = pneg %p98
        $region46: #{tpu_custom_call.1} parent=43 // pred_check_branch
          %623 = sbr.rel (%p621) target = $region48
        $region47: #{tpu_custom_call.1} parent=43 // pred_region
          %s624 = sand.u32 %s83, 1
          %s625 = scalar_lea.sflag [#allocation6], %s624
          %s626 = sand.u32 %s83, 1
          %s627 = smul.addr %s626, 16
          %s628 = scalar_lea.vmem [#allocation9], %s627
          %629 = dma.done %s625, 256
        $region48: #{tpu_custom_call.1} parent=43 // pred_fallthru
          _
      $region44: #{tpu_custom_call.1} parent=5 // pred_fallthru
        _
    $region6: #{tpu_custom_call.1} parent=1 // loop_footer
      %s21 = sadd.s32 1, %s17
    $region7: #{tpu_custom_call.1} parent=1 // loop_footer_branch
      %16 = sbr.rel target = $region3
    $region8: #{tpu_custom_call.1} parent=1 // loop_exit
      _
    %630 = vsyncpa [#allocation5], 1
    %s631 = scalar_lea.sflag [#allocation5], 1
    %632 = vsyncpa %s631, 1
    %633 = vsyncpa [#allocation8], 1
    %s634 = scalar_lea.sflag [#allocation8], 1
    %635 = vsyncpa %s634, 1
    %636 = vsyncpa [#allocation6], 1
    %s637 = scalar_lea.sflag [#allocation6], 1
    %638 = vsyncpa %s637, 1

</llo_original>
